<compile_context>
chip_gen: v6e
topology: v6e:2x2x1
jax: 0.10.0
libtpu: 0.0.40
codegen_flags: <defaults>
</compile_context>

<pallas_src>
import functools

import jax
import jax.numpy as jnp
from jax import lax
from jax.experimental import pallas as pl
from jax.experimental.pallas import tpu as pltpu


def _round_up(x, m):
    return (x + m - 1) // m * m


def _cdiv(a, b):
    return (a + b - 1) // b


def _vmem_capacity_bytes():
    """Physical VMEM per TensorCore; conservative fallback = 64 MiB (v7x)."""
    try:
        info_fn = getattr(pltpu, "get_tpu_info", None)
        if info_fn is not None:
            cap = getattr(info_fn(), "vmem_capacity_bytes", None)
            if cap:
                return int(cap)
    except Exception:
        pass
    return 64 * 2**20


def _pick_tile_p(P, K, vmem_budget, tile_p_max=1024):
    """Largest tile_p (multiple of 8) whose per-tile VMEM footprint fits the
    budget, then capped so the grid has >= 2 steps (v7x megacore sharding)."""
    # Conservative per-point bytes (last dims pad to 128 lanes in VMEM):
    #   input slab bf16, double-buffered : 2 * K * 128 * 2
    #   x value copy bf16                : 1 * K * 128 * 2
    #   f32 intermediates h, y, reshape  : 3 * K * 128 * 4
    #   output f32, double-buffered      : 2 * 128 * 4
    per_point = K * 128 * (2 * 2 + 1 * 2 + 3 * 4) + 2 * 128 * 4
    cap = max(8, vmem_budget // per_point)
    tile_p = min(tile_p_max, cap)
    if P > 8:
        tile_p = min(tile_p, _round_up(_cdiv(P, 2), 8))  # >= 2 grid steps
    else:
        tile_p = min(tile_p, 8)
    return max(8, (tile_p // 8) * 8)


# ----------------------------------------------------------------------------
# Pallas kernel: fused shared-MLP (2x [1x1 conv + folded BN] + ReLU) + max-pool
# over the K neighbor axis.
#
# Input block : (tile_p * K, C0)   bf16   (point-major; rows p*K..p*K+K-1 are
#                                          the K neighbors of point p)
# Output block: (tile_p, C2pad)    f32    (C2pad = 128-multiple, lane-dense)
# ----------------------------------------------------------------------------
def _sa_mlp_maxpool_kernel(f_ref, w1_ref, b1_ref, w2_ref, b2_ref, o_ref):
    tp, c2p = o_ref.shape
    k = f_ref.shape[0] // tp

    x = f_ref[...]                                                    # (tp*K, C0) bf16
    # Layer 1: one big MXU matmul over the fused (point, neighbor) M dim.
    h = jnp.dot(x, w1_ref[...], preferred_element_type=jnp.float32)   # (tp*K, C1p) f32
    h = jnp.maximum(h + b1_ref[...], 0.0)                             # conv1 + BN1 + ReLU
    # Layer 2 (h never leaves VMEM; bf16 cast only feeds the MXU).
    y = jnp.dot(h.astype(w2_ref.dtype), w2_ref[...],
                preferred_element_type=jnp.float32)                   # (tp*K, C2p) f32
    y = jnp.maximum(y + b2_ref[...], 0.0)                             # conv2 + BN2 + ReLU
    # Max over the K neighbors of each point (K is a multiple of 8, so the
    # sublane split below is tile-aligned -> cheap reduce).
    o_ref[...] = jnp.max(y.reshape(tp, k, c2p), axis=1)               # lane-dense store


def sa_mlp_maxpool(feats, w1, b1, w2, b2, *, tile_p_max=1024):
    """feats: [P, K, C0] (point-major grouped features, K % 8 == 0) -> [P, C2] f32.

    Numerics note: feats/weights feed the MXU as bf16 (accumulation, bias,
    ReLU, max stay f32), so expect ~1e-2-level relative differences vs. an
    all-f32 PyTorch reference.
    """
    P, K, C0 = feats.shape
    C1 = w1.shape[1]
    C2 = w2.shape[1]
    C1p = _round_up(C1, 128)
    C2p = _round_up(C2, 128)

    # Zero-pad channel dims to lane-dense widths (tiny tensors; bit-identical
    # math: padded hidden channels are relu(0)=0 and hit zero rows of W2,
    # padded output channels are 0 and sliced off below).
    w1p = jnp.pad(w1, ((0, 0), (0, C1p - C1))).astype(jnp.bfloat16)
    b1p = jnp.pad(b1, ((0, 0), (0, C1p - C1)))
    w2p = jnp.pad(w2, ((0, C1p - C1), (0, C2p - C2))).astype(jnp.bfloat16)
    b2p = jnp.pad(b2, ((0, 0), (0, C2p - C2)))

    vmem_cap = _vmem_capacity_bytes()
    # ~half of physical VMEM: 64 MiB on v5e/v6e (128 MiB parts), 32 MiB on v7x.
    vmem_limit = int(max(32 * 2**20, min(vmem_cap // 2, 100 * 2**20)))
    tile_p = _pick_tile_p(P, K, vmem_budget=int(vmem_limit * 0.7),
                          tile_p_max=tile_p_max)
    grid = _cdiv(P, tile_p)   # ragged tail handled by Pallas block masking

    feats2d = feats.reshape(P * K, C0).astype(jnp.bfloat16)  # no-op cast if already bf16

    out = pl.pallas_call(
        _sa_mlp_maxpool_kernel,
        out_shape=jax.ShapeDtypeStruct((P, C2p), jnp.float32),
        grid_spec=pltpu.PrefetchScalarGridSpec(
            num_scalar_prefetch=0,
            grid=(grid,),
            in_specs=[
                # One contiguous DMA slab of tile_p points x K neighbors.
                # (If profiling on v5e shows exposed DMA, add
                #  pipeline_mode=pl.Buffered(3) on this spec.)
                pl.BlockSpec((tile_p * K, C0), lambda i: (i, 0)),
                pl.BlockSpec((C0, C1p), lambda i: (0, 0)),   # resident weights
                pl.BlockSpec((1, C1p), lambda i: (0, 0)),
                pl.BlockSpec((C1p, C2p), lambda i: (0, 0)),
                pl.BlockSpec((1, C2p), lambda i: (0, 0)),
            ],
            out_specs=pl.BlockSpec((tile_p, C2p), lambda i: (i, 0)),
        ),
        compiler_params=pltpu.CompilerParams(
            dimension_semantics=("parallel",),
            vmem_limit_bytes=vmem_limit,
        ),
    )(feats2d, w1p, b1p, w2p, b2p)
    return out[:, :C2]


# ----------------------------------------------------------------------------
# Plain-JAX glue (sampling / grouping — data-dependent gathers)
# ----------------------------------------------------------------------------
def square_distance(src, dst):
    # src [B,S,3], dst [B,N,3] -> [B,S,N]
    d = -2.0 * jnp.einsum("bsc,bnc->bsn", src, dst)
    d = d + jnp.sum(src * src, axis=-1)[:, :, None]
    d = d + jnp.sum(dst * dst, axis=-1)[:, None, :]
    return d


def index_points(points, idx):
    # points [B,N,C], idx [B,...] int -> [B,...,C]
    return jax.vmap(lambda p, i: p[i])(points, idx)


def farthest_point_sample(xyz, npoint):
    # TODO(synk): PyTorch seeds FPS with torch.randint; we start deterministically at index 0.
    B, N, _ = xyz.shape

    def body(i, state):
        centroids, distance, farthest = state
        centroids = centroids.at[:, i].set(farthest)
        centroid = index_points(xyz, farthest[:, None])            # [B,1,3]
        dist = jnp.sum((xyz - centroid) ** 2, axis=-1)             # [B,N]
        distance = jnp.minimum(distance, dist)
        farthest = jnp.argmax(distance, axis=-1).astype(jnp.int32)
        return centroids, distance, farthest

    init = (jnp.zeros((B, npoint), jnp.int32),
            jnp.full((B, N), 1e10, jnp.float32),
            jnp.zeros((B,), jnp.int32))
    centroids, _, _ = lax.fori_loop(0, npoint, body, init)
    return centroids


def transition_down_forward(xyz, points, params, *, npoint, nsample):
    # TODO(synk): points=None branch of PointNetSetAbstraction is not handled.
    B, N, _ = xyz.shape
    fps_idx = farthest_point_sample(xyz, npoint)                   # [B,S]
    new_xyz = index_points(xyz, fps_idx)                           # [B,S,3]
    dists = square_distance(new_xyz, xyz)                          # [B,S,N]
    # kNN: top_k of negated distances instead of a full O(N log N) argsort.
    # TODO(synk): tie-breaking order may differ from torch.sort on duplicate points.
    _, idx = lax.top_k(-dists, nsample)                            # [B,S,K], nearest-first

    # Pad K up to a multiple of 8 by repeating the nearest neighbor: the max
    # over K is idempotent, so results are unchanged, and the in-kernel
    # reshape/max stays sublane-tile aligned.
    K = nsample
    K_pad = _round_up(max(K, 8), 8)
    if K_pad != K:
        idx = jnp.concatenate(
            [idx, jnp.broadcast_to(idx[..., :1], (B, npoint, K_pad - K))], axis=-1)

    grouped_xyz = index_points(xyz, idx)                           # [B,S,Kp,3]
    grouped_xyz_norm = grouped_xyz - new_xyz[:, :, None, :]
    grouped_points = index_points(points, idx)                     # [B,S,Kp,D]
    # Cast to bf16 here so the concat writes bf16 directly (no extra f32 pass).
    new_points = jnp.concatenate(
        [grouped_xyz_norm.astype(jnp.bfloat16),
         grouped_points.astype(jnp.bfloat16)], axis=-1)            # [B,S,Kp,C0] bf16

    S = npoint
    C0 = new_points.shape[-1]
    feats = new_points.reshape(B * S, K_pad, C0)                   # point-major, free reshape

    w1, b1, w2, b2 = params
    out = sa_mlp_maxpool(feats, w1, b1, w2, b2)                    # [B*S, C2]
    return new_xyz, out.reshape(B, S, -1)


# ----------------------------------------------------------------------------
# Deterministic parameter construction: Conv2d(Ci, Ci+1, 1) + BatchNorm2d(Ci+1)
# (eval mode), folded to W_eff [Ci, Ci+1] and b_eff [1, Ci+1].  Lane padding is
# done inside sa_mlp_maxpool.
# ----------------------------------------------------------------------------
def make_folded_params(key, channels, eps=1e-5):
    assert len(channels) == 3, "2-layer shared MLP (channels[0]->[1]->[2])"
    ws, bs = [], []
    for i in range(2):
        cin, cout = channels[i], channels[i + 1]
        key, kw, kb, kg, kbe, km, kv = jax.random.split(key, 7)
        w = jax.random.normal(kw, (cout, cin), jnp.float32) / jnp.sqrt(float(cin))
        b = 0.05 * jax.random.normal(kb, (cout,), jnp.float32)
        gamma = 1.0 + 0.1 * jax.random.normal(kg, (cout,), jnp.float32)
        beta = 0.1 * jax.random.normal(kbe, (cout,), jnp.float32)
        mean = 0.1 * jax.random.normal(km, (cout,), jnp.float32)
        var = 1.0 + 0.1 * jnp.abs(jax.random.normal(kv, (cout,), jnp.float32))
        s = gamma / jnp.sqrt(var + eps)
        ws.append((w * s[:, None]).T)                              # (cin, cout)
        bs.append((b * s + (beta - mean * s))[None, :])            # (1, cout)
    return [ws[0], bs[0], ws[1], bs[1]]


if __name__ == "__main__":
    B, N = 2, 16
    d_points = 13
    npoint = 8          # k
    nneighbor = 4       # nsample
    channels = [d_points + 3, 32, 32]   # channels[0] already includes the +3 xyz offset

    key = jax.random.PRNGKey(0)
    kx, kp, kw = jax.random.split(key, 3)
    xyz = jax.random.normal(kx, (B, N, 3), jnp.float32)
    points = jax.random.normal(kp, (B, N, d_points), jnp.float32)
    params = make_folded_params(kw, channels)

    fwd = jax.jit(functools.partial(
        transition_down_forward, npoint=npoint, nsample=nneighbor))
    new_xyz, new_points = fwd(xyz, points, params)
    jax.block_until_ready((new_xyz, new_points))

    assert new_xyz.shape == (B, npoint, 3)
    assert new_points.shape == (B, npoint, channels[-1])
    assert bool(jnp.all(jnp.isfinite(new_points)))
    print("KERNEL_OK")
</pallas_src>

<mosaic_0001>
module attributes {stable_mosaic.version = 11 : i64} {
  func.func @_sa_mlp_maxpool_kernel(%arg0: i32, %arg1: memref<64x16xbf16, #tpu.memory_space<vmem>>, %arg2: memref<16x128xbf16, #tpu.memory_space<vmem>>, %arg3: memref<1x128xf32, #tpu.memory_space<vmem>>, %arg4: memref<128x128xbf16, #tpu.memory_space<vmem>>, %arg5: memref<1x128xf32, #tpu.memory_space<vmem>>, %arg6: memref<8x128xf32, #tpu.memory_space<vmem>>) attributes {dimension_semantics = [#tpu.dimension_semantics<parallel>], iteration_bounds = array<i64: 2>, scalar_prefetch = 0 : i64, scratch_operands = 0 : i64, tpu.core_type = #tpu.core_type<tc>, window_params = [{transform_indices = @transform_0, window_bounds = array<i64: 64, 16>}, {pipeline_mode = #tpu.pipeline_mode<synchronous>, transform_indices = @transform_1, window_bounds = array<i64: 16, 128>}, {pipeline_mode = #tpu.pipeline_mode<synchronous>, transform_indices = @transform_2, window_bounds = array<i64: 1, 128>}, {pipeline_mode = #tpu.pipeline_mode<synchronous>, transform_indices = @transform_3, window_bounds = array<i64: 128, 128>}, {pipeline_mode = #tpu.pipeline_mode<synchronous>, transform_indices = @transform_4, window_bounds = array<i64: 1, 128>}, {transform_indices = @transform_5, window_bounds = array<i64: 8, 128>}]} {
    %c0 = arith.constant 0 : index
    %c0_0 = arith.constant 0 : index
    %0 = vector.load %arg1[%c0, %c0_0] : memref<64x16xbf16, #tpu.memory_space<vmem>>, vector<64x16xbf16>
    %c0_1 = arith.constant 0 : index
    %c0_2 = arith.constant 0 : index
    %1 = vector.load %arg2[%c0_1, %c0_2] : memref<16x128xbf16, #tpu.memory_space<vmem>>, vector<16x128xbf16>
    %cst = arith.constant dense<0.000000e+00> : vector<64x128xf32>
    %2 = tpu.matmul %0, %1, %cst {dimension_numbers = #tpu.dot_dimension_numbers<[1], [0], [0], [1], [0, 0, 1, 1], [], []>} : vector<64x16xbf16>, vector<16x128xbf16>, vector<64x128xf32> -> vector<64x128xf32>
    %c0_3 = arith.constant 0 : index
    %c0_4 = arith.constant 0 : index
    %3 = vector.load %arg3[%c0_3, %c0_4] : memref<1x128xf32, #tpu.memory_space<vmem>>, vector<1x128xf32>
    %4 = vector.broadcast %3 : vector<1x128xf32> to vector<64x128xf32>
    %5 = arith.addf %2, %4 : vector<64x128xf32>
    %cst_5 = arith.constant 0.000000e+00 : f32
    %6 = vector.broadcast %cst_5 : f32 to vector<64x128xf32>
    %7 = arith.maximumf %5, %6 : vector<64x128xf32>
    %8 = arith.truncf %7 : vector<64x128xf32> to vector<64x128xbf16>
    %c0_6 = arith.constant 0 : index
    %c0_7 = arith.constant 0 : index
    %9 = vector.load %arg4[%c0_6, %c0_7] : memref<128x128xbf16, #tpu.memory_space<vmem>>, vector<128x128xbf16>
    %cst_8 = arith.constant dense<0.000000e+00> : vector<64x128xf32>
    %10 = tpu.matmul %8, %9, %cst_8 {dimension_numbers = #tpu.dot_dimension_numbers<[1], [0], [0], [1], [0, 0, 1, 1], [], []>} : vector<64x128xbf16>, vector<128x128xbf16>, vector<64x128xf32> -> vector<64x128xf32>
    %c0_9 = arith.constant 0 : index
    %c0_10 = arith.constant 0 : index
    %11 = vector.load %arg5[%c0_9, %c0_10] : memref<1x128xf32, #tpu.memory_space<vmem>>, vector<1x128xf32>
    %12 = vector.broadcast %11 : vector<1x128xf32> to vector<64x128xf32>
    %13 = arith.addf %10, %12 : vector<64x128xf32>
    %cst_11 = arith.constant 0.000000e+00 : f32
    %14 = vector.broadcast %cst_11 : f32 to vector<64x128xf32>
    %15 = arith.maximumf %13, %14 : vector<64x128xf32>
    %16 = vector.shape_cast %15 : vector<64x128xf32> to vector<8x8x128xf32>
    %cst_12 = arith.constant dense<0xFF800000> : vector<8x128xf32>
    %17 = vector.multi_reduction <maximumf>, %16, %cst_12 [1] : vector<8x8x128xf32> to vector<8x128xf32>
    %c0_13 = arith.constant 0 : index
    %c0_14 = arith.constant 0 : index
    %18 = vector.load %arg6[%c0_13, %c0_14] : memref<8x128xf32, #tpu.memory_space<vmem>>, vector<8x128xf32>
    tpu.vector_store %arg6[%c0_13, %c0_14], %17 {strides = array<i32>} : memref<8x128xf32, #tpu.memory_space<vmem>>, vector<8x128xf32>,
    return
  }
  func.func @transform_0(%arg0: i32) -> (i32, i32) {
    %c0_i32 = arith.constant 0 : i32
    %c0_i32_0 = arith.constant 0 : i32
    return %arg0, %c0_i32 : i32, i32
  }
  func.func @transform_1(%arg0: i32) -> (i32, i32) {
    %c0_i32 = arith.constant 0 : i32
    %c0_i32_0 = arith.constant 0 : i32
    %c0_i32_1 = arith.constant 0 : i32
    return %c0_i32, %c0_i32_0 : i32, i32
  }
  func.func @transform_2(%arg0: i32) -> (i32, i32) {
    %c0_i32 = arith.constant 0 : i32
    %c0_i32_0 = arith.constant 0 : i32
    %c0_i32_1 = arith.constant 0 : i32
    return %c0_i32, %c0_i32_0 : i32, i32
  }
  func.func @transform_3(%arg0: i32) -> (i32, i32) {
    %c0_i32 = arith.constant 0 : i32
    %c0_i32_0 = arith.constant 0 : i32
    %c0_i32_1 = arith.constant 0 : i32
    return %c0_i32, %c0_i32_0 : i32, i32
  }
  func.func @transform_4(%arg0: i32) -> (i32, i32) {
    %c0_i32 = arith.constant 0 : i32
    %c0_i32_0 = arith.constant 0 : i32
    %c0_i32_1 = arith.constant 0 : i32
    return %c0_i32, %c0_i32_0 : i32, i32
  }
  func.func @transform_5(%arg0: i32) -> (i32, i32) {
    %c0_i32 = arith.constant 0 : i32
    %c0_i32_0 = arith.constant 0 : i32
    return %arg0, %c0_i32 : i32, i32
  }
}

</mosaic_0001>

<llo_original>
// kernel: custom-call.8
$region0: #{custom-call.8}
  %s0 = inlined_call_operand.vmem [shape: f32[2,16], index: 0, kind: output, shape index: {}]

// kernel: transition_down_forward.1
$region0: #{transition_down_forward.1}
  #allocation0 [shape = 'u32[]', space=smem, size = 0x4, offset = 0x4, fixed_abs, tag = 'smem constant byte address 0x4 - core index']
  #allocation1 [shape = 'u32[144,128]{1,0:T(1,128)}', space=vmem, size = 0x12000, scoped, tag = 'internal scratch']
  %s0 = inlined_call_operand.vmem [shape: bf16[128,16], index: 0, kind: input, shape index: {}]
  %s1 = inlined_call_operand.vmem [shape: bf16[16,128], index: 1, kind: input, shape index: {}]
  %s2 = inlined_call_operand.vmem [shape: f32[1,128], index: 2, kind: input, shape index: {}]
  %s3 = inlined_call_operand.vmem [shape: bf16[128,128], index: 3, kind: input, shape index: {}]
  %s4 = inlined_call_operand.vmem [shape: f32[1,128], index: 4, kind: input, shape index: {}]
  %s5 = inlined_call_operand.vmem [shape: f32[16,128], index: 5, kind: output, shape index: {}]
  %s6 = sld [smem:[#allocation0]]
  $region53: #{transition_down_forward.1} parent=0
    _
  %s8 = ssub.s32 1, %s6
  %s9 = scalar_select 0, %s8, %s6
  loop: start=0, step=1, limit=4
  $region2: #{transition_down_forward.1} parent=0 // loop_pre_header
    _
  $region3: #{transition_down_forward.1} parent=0 // loop_header
    %s11 = sphi 0, %s15
    %p12 = scmp.ge.s32.totalorder %s11, 4
    %s21 = sphi 0, %s23
    %s24 = sphi 0, %s21
    %s25 = sphi 0, %s24
    %s41 = sphi 0, %s25
    %s45 = sphi 0, %s45
    %s47 = sphi 0, %s45
    %s48 = sphi 0, %s47
    %s62 = sphi 0, %s48
    %s66 = sphi 0, %s66
    %s68 = sphi 0, %s66
    %s69 = sphi 0, %s68
    %s83 = sphi 0, %s69
    %s87 = sphi 0, %s87
    %s89 = sphi 0, %s87
    %s90 = sphi 0, %s89
    %s104 = sphi 0, %s90
    %s108 = sphi 0, %s108
    %s110 = sphi 0, %s108
    %s111 = sphi 0, %s110
    %s125 = sphi 0, %s111
    %s131 = sphi 0, %s133
    %s134 = sphi 0, %s131
    %s135 = sphi 0, %s134
    %s151 = sphi 0, %s135
  $region4: #{transition_down_forward.1} parent=0 // loop_header_branch
    %14 = sbr.rel (%p12) target = $region8
  $region5: #{transition_down_forward.1} parent=0 // loop_body
    %s16 = ssub.s32 %s11, 1
    %s17 = ssub.s32 %s11, 2
    %s18 = sadd.s32 %s11, 1
    %s19 = ssub.s32 %s11, %s18
    %p20 = scmp.eq.s32.totalorder %s19, 0
    %s22 = sadd.s32 %s21, 1
    %s23 = scalar_select %p20, %s21, %s22
    %p26 = pneg %p20
    %p27 = scmp.eq.s32.totalorder %s11, 1
    %p28 = por %p26, %p27
    %p29 = scmp.ne.s32.totalorder %s21, %s24
    %p30 = scmp.eq.s32.totalorder %s11, 0
    %p31 = por %p29, %p30
    %p32 = scmp.ne.s32.totalorder %s21, %s24
    %p33 = scmp.eq.s32.totalorder %s16, 1
    %p34 = por %p32, %p33
    %p35 = scmp.ne.s32.totalorder %s24, %s25
    %p36 = scmp.eq.s32.totalorder %s16, 0
    %p37 = por %p35, %p36
    %p38 = scmp.ne.s32.totalorder %s24, %s25
    %p39 = scmp.eq.s32.totalorder %s17, 1
    %p40 = por %p38, %p39
    %p42 = scmp.ne.s32.totalorder %s25, %s41
    %p43 = scmp.eq.s32.totalorder %s17, 0
    %p44 = por %p42, %p43
    %s46 = sadd.s32 %s45, 1
    %p49 = scmp.eq.s32.totalorder %s11, 1
    %p50 = scmp.ne.s32.totalorder %s45, %s47
    %p51 = scmp.eq.s32.totalorder %s11, 0
    %p52 = por %p50, %p51
    %p53 = scmp.ne.s32.totalorder %s45, %s47
    %p54 = scmp.eq.s32.totalorder %s16, 1
    %p55 = por %p53, %p54
    %p56 = scmp.ne.s32.totalorder %s47, %s48
    %p57 = scmp.eq.s32.totalorder %s16, 0
    %p58 = por %p56, %p57
    %p59 = scmp.ne.s32.totalorder %s47, %s48
    %p60 = scmp.eq.s32.totalorder %s17, 1
    %p61 = por %p59, %p60
    %p63 = scmp.ne.s32.totalorder %s48, %s62
    %p64 = scmp.eq.s32.totalorder %s17, 0
    %p65 = por %p63, %p64
    %s67 = sadd.s32 %s66, 1
    %p70 = scmp.eq.s32.totalorder %s11, 1
    %p71 = scmp.ne.s32.totalorder %s66, %s68
    %p72 = scmp.eq.s32.totalorder %s11, 0
    %p73 = por %p71, %p72
    %p74 = scmp.ne.s32.totalorder %s66, %s68
    %p75 = scmp.eq.s32.totalorder %s16, 1
    %p76 = por %p74, %p75
    %p77 = scmp.ne.s32.totalorder %s68, %s69
    %p78 = scmp.eq.s32.totalorder %s16, 0
    %p79 = por %p77, %p78
    %p80 = scmp.ne.s32.totalorder %s68, %s69
    %p81 = scmp.eq.s32.totalorder %s17, 1
    %p82 = por %p80, %p81
    %p84 = scmp.ne.s32.totalorder %s69, %s83
    %p85 = scmp.eq.s32.totalorder %s17, 0
    %p86 = por %p84, %p85
    %s88 = sadd.s32 %s87, 1
    %p91 = scmp.eq.s32.totalorder %s11, 1
    %p92 = scmp.ne.s32.totalorder %s87, %s89
    %p93 = scmp.eq.s32.totalorder %s11, 0
    %p94 = por %p92, %p93
    %p95 = scmp.ne.s32.totalorder %s87, %s89
    %p96 = scmp.eq.s32.totalorder %s16, 1
    %p97 = por %p95, %p96
    %p98 = scmp.ne.s32.totalorder %s89, %s90
    %p99 = scmp.eq.s32.totalorder %s16, 0
    %p100 = por %p98, %p99
    %p101 = scmp.ne.s32.totalorder %s89, %s90
    %p102 = scmp.eq.s32.totalorder %s17, 1
    %p103 = por %p101, %p102
    %p105 = scmp.ne.s32.totalorder %s90, %s104
    %p106 = scmp.eq.s32.totalorder %s17, 0
    %p107 = por %p105, %p106
    %s109 = sadd.s32 %s108, 1
    %p112 = scmp.eq.s32.totalorder %s11, 1
    %p113 = scmp.ne.s32.totalorder %s108, %s110
    %p114 = scmp.eq.s32.totalorder %s11, 0
    %p115 = por %p113, %p114
    %p116 = scmp.ne.s32.totalorder %s108, %s110
    %p117 = scmp.eq.s32.totalorder %s16, 1
    %p118 = por %p116, %p117
    %p119 = scmp.ne.s32.totalorder %s110, %s111
    %p120 = scmp.eq.s32.totalorder %s16, 0
    %p121 = por %p119, %p120
    %p122 = scmp.ne.s32.totalorder %s110, %s111
    %p123 = scmp.eq.s32.totalorder %s17, 1
    %p124 = por %p122, %p123
    %p126 = scmp.ne.s32.totalorder %s111, %s125
    %p127 = scmp.eq.s32.totalorder %s17, 0
    %p128 = por %p126, %p127
    %s129 = ssub.s32 %s11, %s18
    %p130 = scmp.eq.s32.totalorder %s129, 0
    %s132 = sadd.s32 %s131, 1
    %s133 = scalar_select %p130, %s131, %s132
    %p136 = pneg %p130
    %p137 = scmp.eq.s32.totalorder %s11, 1
    %p138 = por %p136, %p137
    %p139 = scmp.ne.s32.totalorder %s131, %s134
    %p140 = scmp.eq.s32.totalorder %s11, 0
    %p141 = por %p139, %p140
    %p142 = scmp.ne.s32.totalorder %s131, %s134
    %p143 = scmp.eq.s32.totalorder %s16, 1
    %p144 = por %p142, %p143
    %p145 = scmp.ne.s32.totalorder %s134, %s135
    %p146 = scmp.eq.s32.totalorder %s16, 0
    %p147 = por %p145, %p146
    %p148 = scmp.ne.s32.totalorder %s134, %s135
    %p149 = scmp.eq.s32.totalorder %s17, 1
    %p150 = por %p148, %p149
    %p152 = scmp.ne.s32.totalorder %s135, %s151
    %p153 = scmp.eq.s32.totalorder %s17, 0
    %p154 = por %p152, %p153
    %p155 = scmp.le.s32.totalorder 1, %s11
    %p156 = scmp.lt.s32.totalorder %s11, 3
    %p157 = pnand %p155, %p156
    %p158 = pneg %p157
    // Predicated region
    $region9: #{transition_down_forward.1} parent=5 // pred_check
      _
    $region10: #{transition_down_forward.1} parent=5 // pred_check_branch
      %160 = sbr.rel (%p157) target = $region12
    $region11: #{transition_down_forward.1} parent=5 // pred_region
      %s161 = ssub.s32 %s11, 1
      // Predicated region
      $region13: #{transition_down_forward.1} parent=11 // pred_check
        %p162 = pneg %p58
      $region14: #{transition_down_forward.1} parent=11 // pred_check_branch
        %164 = sbr.rel (%p162) target = $region16
      $region15: #{transition_down_forward.1} parent=11 // pred_region
        _
      $region16: #{transition_down_forward.1} parent=11 // pred_fallthru
        _
      // Predicated region
      $region17: #{transition_down_forward.1} parent=11 // pred_check
        %p165 = pneg %p79
      $region18: #{transition_down_forward.1} parent=11 // pred_check_branch
        %167 = sbr.rel (%p165) target = $region20
      $region19: #{transition_down_forward.1} parent=11 // pred_region
        _
      $region20: #{transition_down_forward.1} parent=11 // pred_fallthru
        _
      // Predicated region
      $region21: #{transition_down_forward.1} parent=11 // pred_check
        %p168 = pneg %p100
      $region22: #{transition_down_forward.1} parent=11 // pred_check_branch
        %170 = sbr.rel (%p168) target = $region24
      $region23: #{transition_down_forward.1} parent=11 // pred_region
        _
      $region24: #{transition_down_forward.1} parent=11 // pred_fallthru
        _
      // Predicated region
      $region25: #{transition_down_forward.1} parent=11 // pred_check
        %p171 = pneg %p121
      $region26: #{transition_down_forward.1} parent=11 // pred_check_branch
        %173 = sbr.rel (%p171) target = $region28
      $region27: #{transition_down_forward.1} parent=11 // pred_region
        _
      $region28: #{transition_down_forward.1} parent=11 // pred_fallthru
        _
    $region12: #{transition_down_forward.1} parent=5 // pred_fallthru
      _
    %p174 = scmp.lt.s32.totalorder %s11, 2
    // Predicated region
    $region29: #{transition_down_forward.1} parent=5 // pred_check
      %p175 = pneg %p174
    $region30: #{transition_down_forward.1} parent=5 // pred_check_branch
      %177 = sbr.rel (%p175) target = $region32
    $region31: #{transition_down_forward.1} parent=5 // pred_region
      // Predicated region
      $region33: #{transition_down_forward.1} parent=31 // pred_check
        %p178 = pneg %p31
      $region34: #{transition_down_forward.1} parent=31 // pred_check_branch
        %180 = sbr.rel (%p178) target = $region36
      $region35: #{transition_down_forward.1} parent=31 // pred_region
        %s181 = smul.u32 8, %s11
        %p182 = scmp.lt.s32.totalorder %s181, 15
        %s183 = scalar_select %p182, %s181, 15
        %s184 = smul.addr %s183, 4
        %s185 = scalar_lea.vmem %s0, %s184
        %s186 = smul.u32 8, %s11
      $region36: #{transition_down_forward.1} parent=31 // pred_fallthru
        _
    $region32: #{transition_down_forward.1} parent=5 // pred_fallthru
      _
    %p187 = scmp.le.s32.totalorder 1, %s11
    %p188 = scmp.lt.s32.totalorder %s11, 3
    %p189 = pnand %p187, %p188
    %p190 = pneg %p189
    // Predicated region
    $region37: #{transition_down_forward.1} parent=5 // pred_check
      _
    $region38: #{transition_down_forward.1} parent=5 // pred_check_branch
      %192 = sbr.rel (%p189) target = $region40
    $region39: #{transition_down_forward.1} parent=5 // pred_region
      %s193 = ssub.s32 %s11, 1
      %s194 = smul.u32 8, %s16
      %p195 = scmp.lt.s32.totalorder %s194, 15
      %s196 = scalar_select %p195, %s194, 15
      %s197 = smul.addr %s196, 4
      %s198 = scalar_lea.vmem %s0, %s197
      %p199 = pneg %p37
      %p200 = pneg %p34
      %p201 = pneg %p58
      %p202 = pneg %p55
      %p203 = pneg %p79
      %p204 = pneg %p76
      %p205 = pneg %p100
      %p206 = pneg %p97
      %p207 = pneg %p121
      %p208 = pneg %p118
      %p209 = pneg %p147
      %p210 = pneg %p144
      %p211 = scmp.lt.s32.totalorder %s16, 1
      %s212 = scalar_select %p211, %s16, 1
      %s213 = smul.addr %s212, 8
      %s214 = scalar_lea.vmem %s5, %s213
      %s215 = smul.u32 8, %s16
      %p216 = scmp.lt.s32.totalorder %s215, 15
      %s217 = scalar_select %p216, %s215, 15
      %s218 = smul.addr %s217, 4
      %s219 = scalar_lea.vmem %s0, %s218
      %s220 = smul.u32 8, %s16
      %p221 = scmp.lt.s32.totalorder %s16, 1
      %s222 = scalar_select %p221, %s16, 1
      %s223 = smul.addr %s222, 8
      %s224 = scalar_lea.vmem %s5, %s223
      %v226 = vld [vmem:[%s219] sm:$0xf]
      %v227 = vld [vmem:[%s219 + $0x4] sm:$0xf]
      %v228 = vld [vmem:[%s219 + $0x8] sm:$0xf]
      %v229 = vld [vmem:[%s219 + $0xc] sm:$0xf]
      %v230 = vld [vmem:[%s219 + $0x10] sm:$0xf]
      %v231 = vld [vmem:[%s219 + $0x14] sm:$0xf]
      %v232 = vld [vmem:[%s219 + $0x18] sm:$0xf]
      %v233 = vld [vmem:[%s219 + $0x1c] sm:$0xf]
      %v234 = vld [vmem:[%s1] sm:$0xf]
      %v235 = vld [vmem:[%s1 + $0x4] sm:$0xf]
      %v236 = vld [vmem:[%s2] sm:$0x1]
      %v238 = vlaneseq
      %v239 = vshrl.u32 %v238, 7
      %v240 = vsub.s32 0, %v239
      %v241 = vrot.slane %v236, %v240
      %v251 = vunpack.c.l.b16 %v226
      %v252 = vunpack.c.l.b16 %v227
      %v253 = vunpack.c.l.b16 %v228
      %v254 = vunpack.c.l.b16 %v229
      %v255 = vunpack.c.l.b16 %v230
      %v256 = vunpack.c.l.b16 %v231
      %v257 = vunpack.c.l.b16 %v232
      %v258 = vunpack.c.l.b16 %v233
      %v259 = vpack.c.b16 %v252, %v251
      %v260 = vpack.c.b16 %v254, %v253
      %v261 = vpack.c.b16 %v256, %v255
      %v262 = vpack.c.b16 %v258, %v257
      %v265 = vunpack.c.l.b16 %v234
      %v266 = vunpack.c.l.b16 %v235
      %v267 = vpack.c.b16 %v266, %v265
      %vm269 = vcmask 130048
      %v271 = vsel %vm269, %v259, 0
      %v274 = vsel %vm269, %v260, 0
      %v277 = vsel %vm269, %v261, 0
      %v280 = vsel %vm269, %v262, 0
      %282 = vmatprep.subr.bf16.mxu0 0
      %283 = vmatpush1.bf16.msra.mxu0 0
      %284 = vmatprep.subr.bf16.mxu0 0
      %285 = vmatpush1.bf16.msra.mxu0 0
      %286 = vmatprep.subr.bf16.mxu0 0
      %287 = vmatpush1.bf16.msra.mxu0 0
      %288 = vmatprep.subr.bf16.mxu0 0
      %289 = vmatpush1.bf16.msra.mxu0 0
      %290 = vmatprep.subr.bf16.mxu0 0
      %291 = vmatpush1.bf16.msra.mxu0 0
      %292 = vmatprep.subr.bf16.mxu0 0
      %293 = vmatpush1.bf16.msra.mxu0 0
      %294 = vmatprep.subr.bf16.mxu0 0
      %295 = vmatpush1.bf16.msra.mxu0 0
      %296 = vmatprep.subr.bf16.mxu0 0
      %297 = vmatpush1.bf16.msra.mxu0 %v267
      %298 = vmatprep.subr.bf16.mxu0 0
      %299 = vmatpush2.bf16.msra.mxu0 0
      %300 = vmatprep.subr.bf16.mxu0 0
      %301 = vmatpush2.bf16.msra.mxu0 0
      %302 = vmatprep.subr.bf16.mxu0 0
      %303 = vmatpush2.bf16.msra.mxu0 0
      %304 = vmatprep.subr.bf16.mxu0 0
      %305 = vmatpush2.bf16.msra.mxu0 0
      %306 = vmatprep.subr.bf16.mxu0 0
      %307 = vmatpush2.bf16.msra.mxu0 0
      %308 = vmatprep.subr.bf16.mxu0 0
      %309 = vmatpush2.bf16.msra.mxu0 0
      %310 = vmatprep.subr.bf16.mxu0 0
      %311 = vmatpush2.bf16.msra.mxu0 0
      %312 = vmatprep.subr.bf16.mxu0 0
      %313 = vmatpush2.bf16.msra.mxu0 0
      %314 = vmatprep.mubr.bf16.mxu0 0
      %315 = vmatmul.mubr.bf16.gmra.mxu0 %v271
      %v316 = vpop.f32.mrf.mxu0
      %v317 = vadd.f32 %v241, %v316
      %v318 = vpop.f32.mrf.mxu0
      %v319 = vpop.f32.mrf.mxu0
      %v320 = vadd.f32 %v241, %v319
      %v321 = vpop.f32.mrf.mxu0
      %322 = vmatprep.mubr.bf16.mxu0 0
      %323 = vmatmul.mubr.bf16.gmra.mxu0 %v274
      %v324 = vpop.f32.mrf.mxu0
      %v325 = vadd.f32 %v241, %v324
      %v326 = vpop.f32.mrf.mxu0
      %v327 = vpop.f32.mrf.mxu0
      %v328 = vadd.f32 %v241, %v327
      %v329 = vpop.f32.mrf.mxu0
      %330 = vmatprep.mubr.bf16.mxu0 0
      %331 = vmatmul.mubr.bf16.gmra.mxu0 %v277
      %v332 = vpop.f32.mrf.mxu0
      %v333 = vadd.f32 %v241, %v332
      %v334 = vpop.f32.mrf.mxu0
      %v335 = vpop.f32.mrf.mxu0
      %v336 = vadd.f32 %v241, %v335
      %v337 = vpop.f32.mrf.mxu0
      %338 = vmatprep.mubr.bf16.mxu0 0
      %339 = vmatmul.mubr.bf16.gmra.mxu0 %v280
      %v340 = vpop.f32.mrf.mxu0
      %v341 = vadd.f32 %v241, %v340
      %v342 = vpop.f32.mrf.mxu0
      %v343 = vpop.f32.mrf.mxu0
      %v344 = vadd.f32 %v241, %v343
      %v345 = vpop.f32.mrf.mxu0
      %346 = vdwg.mxu0
      %v347 = vmax.f32 %v317, 0.0
      %v348 = vmax.f32 %v320, 0.0
      %v349 = vmax.f32 %v325, 0.0
      %v350 = vmax.f32 %v328, 0.0
      %v351 = vmax.f32 %v333, 0.0
      %v352 = vmax.f32 %v336, 0.0
      %v353 = vmax.f32 %v341, 0.0
      %v354 = vmax.f32 %v344, 0.0
      %v355 = vpack.c.bf16 %v348, %v347
      %v356 = vpack.c.bf16 %v350, %v349
      %v357 = vpack.c.bf16 %v352, %v351
      %v358 = vpack.c.bf16 %v354, %v353
      %v359 = vld [vmem:[%s3] sm:$0xf]
      %v360 = vld [vmem:[%s3 + $0x4] sm:$0xf]
      %v361 = vld [vmem:[%s3 + $0x8] sm:$0xf]
      %v362 = vld [vmem:[%s3 + $0xc] sm:$0xf]
      %v363 = vld [vmem:[%s3 + $0x10] sm:$0xf]
      %v364 = vld [vmem:[%s3 + $0x14] sm:$0xf]
      %v365 = vld [vmem:[%s3 + $0x18] sm:$0xf]
      %v366 = vld [vmem:[%s3 + $0x1c] sm:$0xf]
      %v367 = vld [vmem:[%s3 + $0x20] sm:$0xf]
      %v368 = vld [vmem:[%s3 + $0x24] sm:$0xf]
      %v369 = vld [vmem:[%s3 + $0x28] sm:$0xf]
      %v370 = vld [vmem:[%s3 + $0x2c] sm:$0xf]
      %v371 = vld [vmem:[%s3 + $0x30] sm:$0xf]
      %v372 = vld [vmem:[%s3 + $0x34] sm:$0xf]
      %v373 = vld [vmem:[%s3 + $0x38] sm:$0xf]
      %v374 = vld [vmem:[%s3 + $0x3c] sm:$0xf]
      %v375 = vld [vmem:[%s4] sm:$0x1]
      %v377 = vlaneseq
      %v378 = vshrl.u32 %v377, 7
      %v379 = vsub.s32 0, %v378
      %v380 = vrot.slane %v375, %v379
      %v398 = vunpack.c.l.b16 %v359
      %v399 = vunpack.c.l.b16 %v360
      %v400 = vunpack.c.l.b16 %v361
      %v401 = vunpack.c.l.b16 %v362
      %v402 = vunpack.c.l.b16 %v363
      %v403 = vunpack.c.l.b16 %v364
      %v404 = vunpack.c.l.b16 %v365
      %v405 = vunpack.c.l.b16 %v366
      %v406 = vunpack.c.l.b16 %v367
      %v407 = vunpack.c.l.b16 %v368
      %v408 = vunpack.c.l.b16 %v369
      %v409 = vunpack.c.l.b16 %v370
      %v410 = vunpack.c.l.b16 %v371
      %v411 = vunpack.c.l.b16 %v372
      %v412 = vunpack.c.l.b16 %v373
      %v413 = vunpack.c.l.b16 %v374
      %v414 = vpack.c.b16 %v399, %v398
      %v415 = vpack.c.b16 %v401, %v400
      %v416 = vpack.c.b16 %v403, %v402
      %v417 = vpack.c.b16 %v405, %v404
      %v418 = vpack.c.b16 %v407, %v406
      %v419 = vpack.c.b16 %v409, %v408
      %v420 = vpack.c.b16 %v411, %v410
      %v421 = vpack.c.b16 %v413, %v412
      %430 = vmatprep.subr.bf16.mxu0 0
      %431 = vmatpush1.bf16.msra.mxu0 %v421
      %432 = vmatprep.subr.bf16.mxu0 0
      %433 = vmatpush1.bf16.msra.mxu0 %v420
      %434 = vmatprep.subr.bf16.mxu0 0
      %435 = vmatpush1.bf16.msra.mxu0 %v419
      %436 = vmatprep.subr.bf16.mxu0 0
      %437 = vmatpush1.bf16.msra.mxu0 %v418
      %438 = vmatprep.subr.bf16.mxu0 0
      %439 = vmatpush1.bf16.msra.mxu0 %v417
      %440 = vmatprep.subr.bf16.mxu0 0
      %441 = vmatpush1.bf16.msra.mxu0 %v416
      %442 = vmatprep.subr.bf16.mxu0 0
      %443 = vmatpush1.bf16.msra.mxu0 %v415
      %444 = vmatprep.subr.bf16.mxu0 0
      %445 = vmatpush1.bf16.msra.mxu0 %v414
      %446 = vmatprep.subr.bf16.mxu0 0
      %447 = vmatpush2.bf16.msra.mxu0 0
      %448 = vmatprep.subr.bf16.mxu0 0
      %449 = vmatpush2.bf16.msra.mxu0 0
      %450 = vmatprep.subr.bf16.mxu0 0
      %451 = vmatpush2.bf16.msra.mxu0 0
      %452 = vmatprep.subr.bf16.mxu0 0
      %453 = vmatpush2.bf16.msra.mxu0 0
      %454 = vmatprep.subr.bf16.mxu0 0
      %455 = vmatpush2.bf16.msra.mxu0 0
      %456 = vmatprep.subr.bf16.mxu0 0
      %457 = vmatpush2.bf16.msra.mxu0 0
      %458 = vmatprep.subr.bf16.mxu0 0
      %459 = vmatpush2.bf16.msra.mxu0 0
      %460 = vmatprep.subr.bf16.mxu0 0
      %461 = vmatpush2.bf16.msra.mxu0 0
      %462 = vmatprep.mubr.bf16.mxu0 0
      %463 = vmatmul.mubr.bf16.gmra.mxu0 %v355
      %v464 = vpop.f32.mrf.mxu0
      %v465 = vadd.f32 %v380, %v464
      %v466 = vpop.f32.mrf.mxu0
      %v467 = vpop.f32.mrf.mxu0
      %v468 = vadd.f32 %v380, %v467
      %v469 = vpop.f32.mrf.mxu0
      %470 = vmatprep.mubr.bf16.mxu0 0
      %471 = vmatmul.mubr.bf16.gmra.mxu0 %v356
      %v472 = vpop.f32.mrf.mxu0
      %v473 = vadd.f32 %v380, %v472
      %v474 = vpop.f32.mrf.mxu0
      %v475 = vpop.f32.mrf.mxu0
      %v476 = vadd.f32 %v380, %v475
      %v477 = vpop.f32.mrf.mxu0
      %478 = vmatprep.mubr.bf16.mxu0 0
      %479 = vmatmul.mubr.bf16.gmra.mxu0 %v357
      %v480 = vpop.f32.mrf.mxu0
      %v481 = vadd.f32 %v380, %v480
      %v482 = vpop.f32.mrf.mxu0
      %v483 = vpop.f32.mrf.mxu0
      %v484 = vadd.f32 %v380, %v483
      %v485 = vpop.f32.mrf.mxu0
      %486 = vmatprep.mubr.bf16.mxu0 0
      %487 = vmatmul.mubr.bf16.gmra.mxu0 %v358
      %v488 = vpop.f32.mrf.mxu0
      %v489 = vadd.f32 %v380, %v488
      %v490 = vpop.f32.mrf.mxu0
      %v491 = vpop.f32.mrf.mxu0
      %v492 = vadd.f32 %v380, %v491
      %v493 = vpop.f32.mrf.mxu0
      %494 = vdwg.mxu0
      %v495 = vmax.f32 %v465, 0.0
      %v496 = vmax.f32 %v468, 0.0
      %v497 = vmax.f32 %v473, 0.0
      %v498 = vmax.f32 %v476, 0.0
      %v499 = vmax.f32 %v481, 0.0
      %v500 = vmax.f32 %v484, 0.0
      %v501 = vmax.f32 %v489, 0.0
      %v502 = vmax.f32 %v492, 0.0
      %v503 = vrot.slane %v495, 4
      %v504 = vmax.f32 %v495, %v503
      %v505 = vrot.slane %v504, 2
      %v506 = vmax.f32 %v504, %v505
      %v507 = vrot.slane %v506, 1
      %v508 = vmax.f32 %v506, %v507
      %v509 = vrot.slane %v496, 4
      %v510 = vmax.f32 %v496, %v509
      %v511 = vrot.slane %v510, 2
      %v512 = vmax.f32 %v510, %v511
      %v513 = vrot.slane %v512, 1
      %v514 = vmax.f32 %v512, %v513
      %v515 = vrot.slane %v497, 4
      %v516 = vmax.f32 %v497, %v515
      %v517 = vrot.slane %v516, 2
      %v518 = vmax.f32 %v516, %v517
      %v519 = vrot.slane %v518, 1
      %v520 = vmax.f32 %v518, %v519
      %v521 = vrot.slane %v498, 4
      %v522 = vmax.f32 %v498, %v521
      %v523 = vrot.slane %v522, 2
      %v524 = vmax.f32 %v522, %v523
      %v525 = vrot.slane %v524, 1
      %v526 = vmax.f32 %v524, %v525
      %v527 = vrot.slane %v499, 4
      %v528 = vmax.f32 %v499, %v527
      %v529 = vrot.slane %v528, 2
      %v530 = vmax.f32 %v528, %v529
      %v531 = vrot.slane %v530, 1
      %v532 = vmax.f32 %v530, %v531
      %v533 = vrot.slane %v500, 4
      %v534 = vmax.f32 %v500, %v533
      %v535 = vrot.slane %v534, 2
      %v536 = vmax.f32 %v534, %v535
      %v537 = vrot.slane %v536, 1
      %v538 = vmax.f32 %v536, %v537
      %v539 = vrot.slane %v501, 4
      %v540 = vmax.f32 %v501, %v539
      %v541 = vrot.slane %v540, 2
      %v542 = vmax.f32 %v540, %v541
      %v543 = vrot.slane %v542, 1
      %v544 = vmax.f32 %v542, %v543
      %v545 = vrot.slane %v502, 4
      %v546 = vmax.f32 %v502, %v545
      %v547 = vrot.slane %v546, 2
      %v548 = vmax.f32 %v546, %v547
      %v549 = vrot.slane %v548, 1
      %v550 = vmax.f32 %v548, %v549
      %vm559 = vcmask 1041409
      %v560 = vsel %vm559, %v514, %v508
      %vm561 = vcmask 1042434
      %v562 = vsel %vm561, %v520, %v560
      %vm563 = vcmask 1043459
      %v564 = vsel %vm563, %v526, %v562
      %vm565 = vcmask 1044484
      %v566 = vsel %vm565, %v532, %v564
      %vm567 = vcmask 1045509
      %v568 = vsel %vm567, %v538, %v566
      %vm569 = vcmask 1046534
      %v570 = vsel %vm569, %v544, %v568
      %vm571 = vcmask 1047559
      %v572 = vsel %vm571, %v550, %v570
      %574 = vst [vmem:[%s224] sm:$0xff] %v572
      %p575 = scmp.lt.s32.totalorder %s16, 1
      %s576 = scalar_select %p575, %s16, 1
      %s577 = smul.addr %s576, 8
      %s578 = scalar_lea.vmem %s5, %s577
      // Predicated region
      $region41: #{transition_down_forward.1} parent=39 // pred_check
        %p579 = pneg %p144
      $region42: #{transition_down_forward.1} parent=39 // pred_check_branch
        %581 = sbr.rel (%p579) target = $region44
      $region43: #{transition_down_forward.1} parent=39 // pred_region
        _
      $region44: #{transition_down_forward.1} parent=39 // pred_fallthru
        _
    $region40: #{transition_down_forward.1} parent=5 // pred_fallthru
      _
    %p582 = scmp.le.s32.totalorder 2, %s11
    // Predicated region
    $region45: #{transition_down_forward.1} parent=5 // pred_check
      %p583 = pneg %p582
    $region46: #{transition_down_forward.1} parent=5 // pred_check_branch
      %585 = sbr.rel (%p583) target = $region48
    $region47: #{transition_down_forward.1} parent=5 // pred_region
      %s586 = ssub.s32 %s11, 2
      // Predicated region
      $region49: #{transition_down_forward.1} parent=47 // pred_check
        %p587 = pneg %p150
      $region50: #{transition_down_forward.1} parent=47 // pred_check_branch
        %589 = sbr.rel (%p587) target = $region52
      $region51: #{transition_down_forward.1} parent=47 // pred_region
        %p590 = scmp.lt.s32.totalorder %s17, 1
        %s591 = scalar_select %p590, %s17, 1
        %s592 = smul.addr %s591, 8
        %s593 = scalar_lea.vmem %s5, %s592
      $region52: #{transition_down_forward.1} parent=47 // pred_fallthru
        _
    $region48: #{transition_down_forward.1} parent=5 // pred_fallthru
      _
  $region6: #{transition_down_forward.1} parent=0 // loop_footer
    %s15 = sadd.s32 1, %s11
  $region7: #{transition_down_forward.1} parent=0 // loop_footer_branch
    %10 = sbr.rel target = $region3
  $region8: #{transition_down_forward.1} parent=0 // loop_exit
    _

</llo_original>
